<compile_context>
chip_gen: v7x
topology: tpu7x:2x2x1
jax: 0.10.0
libtpu: 0.0.40
codegen_flags: <defaults>
</compile_context>

<pallas_src>
import jax
import jax.numpy as jnp
from jax.experimental import pallas as pl
from jax.experimental.pallas import tpu as pltpu


def _round_up(a, b):
    return (a + b - 1) // b * b


def _aggregator_kernel(x_ref, hq_ref, w1_ref, w2_ref, o_ref):
    # Tile shapes:
    #   x_ref : (tile_n, emb)            input dtype (e.g. f32), streamed
    #   hq_ref: (1, nhead*size_w12)      f32, precomputed query contribution
    #   w1_ref: (emb, nhead*size_w12)    bf16 block-diagonal (x-part of W1)
    #   w2_ref: (nhead*size_w12, nhead)  bf16 block-diagonal
    #   o_ref : (tile_n, nhead)
    x = x_ref[...].astype(w1_ref.dtype)                      # bf16 cast in VMEM/vregs
    hidden = jnp.dot(x, w1_ref[...],
                     preferred_element_type=jnp.float32)     # f32 accumulation
    hidden = jnp.maximum(hidden + hq_ref[...], 0.0)          # bias + ReLU in f32
    attn = jnp.dot(hidden.astype(w2_ref.dtype), w2_ref[...],
                   preferred_element_type=jnp.float32)       # (tile_n, nhead)
    o_ref[...] = attn.astype(o_ref.dtype)


def prepare_aggregator_params(q_aggregator, ffn_w1, ffn_w2, *, nhead, head_dim,
                              mem_size_factor, ffn_hidden_size_factor,
                              compute_dtype=jnp.bfloat16):
    """One-time (per parameter set) packing.  Cache the result across calls."""
    size_w11 = head_dim * (mem_size_factor + 1)
    size_w12 = size_w11 * ffn_hidden_size_factor
    emb = nhead * head_dim
    hdim = nhead * size_w12
    dq = head_dim * mem_size_factor

    w1 = ffn_w1.reshape(nhead, size_w11, size_w12)
    w2 = ffn_w2.reshape(nhead, size_w12)
    q = q_aggregator.reshape(nhead, dq)

    eye = jnp.eye(nhead, dtype=jnp.float32)
    # Block-diagonal x-part of W1: [h*head_dim+d, g*size_w12+f] = w1[h,d,f]*eye[h,g]
    w1_blk = jnp.einsum('hdf,hg->hdgf', w1[:, :head_dim, :], eye
                        ).reshape(emb, hdim).astype(compute_dtype)
    # Block-diagonal W2: [h*size_w12+f, g] = w2[h,f]*eye[h,g]
    w2_blk = jnp.einsum('hf,hg->hfg', w2, eye
                        ).reshape(hdim, nhead).astype(compute_dtype)
    # Row-independent query contribution:  q_h @ W1_h[head_dim:, :]  (kept in f32)
    hq = jnp.einsum('hq,hqf->hf', q, w1[:, head_dim:, :]
                    ).reshape(1, hdim).astype(jnp.float32)
    return hq, w1_blk, w2_blk


def additive_attention_aggregator(x, hq, w1_blk, w2_blk, *, nhead, tile_n=1024):
    """x: (bs, seq, emb); packed params from prepare_aggregator_params."""
    bs, seq_len, emb = x.shape
    assert w1_blk.shape[0] == emb
    hdim = w1_blk.shape[1]
    n_rows = bs * seq_len
    x2 = x.reshape(n_rows, emb)                              # zero-copy, no pad/cast

    # Row tile: multiple of 8, capped so the grid has >= 2 tiles when possible
    # (v7x has 2 TensorCores; the axis is marked "parallel").
    cap = _round_up(max((n_rows + 1) // 2, 8), 8)
    tile_n = _round_up(max(8, min(int(tile_n), cap)), 8)
    grid = (pl.cdiv(n_rows, tile_n),)                        # partial last block OK

    out = pl.pallas_call(
        _aggregator_kernel,
        out_shape=jax.ShapeDtypeStruct((n_rows, nhead), x.dtype),
        grid=grid,
        in_specs=[
            pl.BlockSpec((tile_n, emb), lambda i: (i, 0)),   # x: streams over tiles
            pl.BlockSpec((1, hdim), lambda i: (0, 0)),       # hq: resident
            pl.BlockSpec((emb, hdim), lambda i: (0, 0)),     # w1_blk: resident
            pl.BlockSpec((hdim, nhead), lambda i: (0, 0)),   # w2_blk: resident
        ],
        out_specs=pl.BlockSpec((tile_n, nhead), lambda i: (i, 0)),
        compiler_params=pltpu.CompilerParams(
            dimension_semantics=("parallel",),
            vmem_limit_bytes=32 * 1024 * 1024),
    )(x2, hq, w1_blk, w2_blk)                                # (n_rows, nhead)

    return out.reshape(bs, seq_len, nhead, 1)


def _reference(x, q_aggregator, ffn_w1, ffn_w2, *, nhead, head_dim,
               mem_size_factor, ffn_hidden_size_factor):
    """Pure-JAX replica of the PyTorch forward (f32, for the self-check)."""
    bs, seq_len, _ = x.shape
    xh = x.reshape(bs, seq_len, nhead, head_dim)
    q = jnp.broadcast_to(q_aggregator,
                         (bs, seq_len, nhead, head_dim * mem_size_factor))
    concat = jnp.concatenate([xh, q], axis=-1)[..., None, :]   # (bs,seq,h,1,w11)
    hidden = jnp.matmul(concat, ffn_w1)                        # (bs,seq,h,1,w12)
    hidden = jnp.maximum(hidden, 0.0)
    attn = jnp.matmul(hidden, ffn_w2)                          # (bs,seq,h,1,1)
    return jnp.squeeze(attn, axis=-1)                          # (bs,seq,h,1)


if __name__ == "__main__":
    # Module hyper-params (small, consistent with __init__):
    nhead = 4
    head_dim = 8
    mem_size_factor = 4
    ffn_hidden_size_factor = 4
    size_w11 = head_dim * (mem_size_factor + 1)           # 40
    size_w12 = size_w11 * ffn_hidden_size_factor          # 160

    bs, seq_len = 2, 8
    emb = nhead * head_dim                                # 32

    key = jax.random.PRNGKey(0)
    k_x, k_q, k_w1, k_w2 = jax.random.split(key, 4)

    x = jax.random.normal(k_x, (bs, seq_len, emb), dtype=jnp.float32)
    # torch.randn-style parameter init; biases are zero and unused in forward.
    q_aggregator = jax.random.normal(
        k_q, (1, 1, nhead, head_dim * mem_size_factor), dtype=jnp.float32)
    ffn_w1 = jax.random.normal(
        k_w1, (1, 1, nhead, size_w11, size_w12), dtype=jnp.float32)
    ffn_w2 = jax.random.normal(
        k_w2, (1, 1, nhead, size_w12, 1), dtype=jnp.float32)

    # One-time weight packing (hoisted out of the per-call path).
    hq, w1_blk, w2_blk = prepare_aggregator_params(
        q_aggregator, ffn_w1, ffn_w2,
        nhead=nhead, head_dim=head_dim,
        mem_size_factor=mem_size_factor,
        ffn_hidden_size_factor=ffn_hidden_size_factor,
        compute_dtype=jnp.bfloat16)

    out = additive_attention_aggregator(
        x, hq, w1_blk, w2_blk, nhead=nhead)
    out = jax.block_until_ready(out)

    ref = _reference(
        x, q_aggregator, ffn_w1, ffn_w2,
        nhead=nhead, head_dim=head_dim,
        mem_size_factor=mem_size_factor,
        ffn_hidden_size_factor=ffn_hidden_size_factor)

    assert out.shape == (bs, seq_len, nhead, 1), out.shape
    # bf16 MXU operands with f32 accumulation: compare with an output-scale-
    # normalized max error (robust to individual near-zero outputs).
    rel_err = float(jnp.max(jnp.abs(out - ref)) / (jnp.max(jnp.abs(ref)) + 1e-6))
    assert rel_err < 2e-2, f"mismatch vs reference: normalized max err {rel_err}"

    print("KERNEL_OK")
</pallas_src>

<mosaic_0001>
module attributes {stable_mosaic.version = 11 : i64} {
  func.func @_aggregator_kernel(%arg0: i32, %arg1: memref<8x32xf32, #tpu.memory_space<vmem>>, %arg2: memref<1x640xf32, #tpu.memory_space<vmem>>, %arg3: memref<32x640xbf16, #tpu.memory_space<vmem>>, %arg4: memref<640x4xbf16, #tpu.memory_space<vmem>>, %arg5: memref<8x4xf32, #tpu.memory_space<vmem>>) attributes {dimension_semantics = [#tpu.dimension_semantics<parallel>], iteration_bounds = array<i64: 2>, scalar_prefetch = 0 : i64, scratch_operands = 0 : i64, tpu.core_type = #tpu.core_type<tc>, window_params = [{transform_indices = @transform_0, window_bounds = array<i64: 8, 32>}, {pipeline_mode = #tpu.pipeline_mode<synchronous>, transform_indices = @transform_1, window_bounds = array<i64: 1, 640>}, {pipeline_mode = #tpu.pipeline_mode<synchronous>, transform_indices = @transform_2, window_bounds = array<i64: 32, 640>}, {pipeline_mode = #tpu.pipeline_mode<synchronous>, transform_indices = @transform_3, window_bounds = array<i64: 640, 4>}, {transform_indices = @transform_4, window_bounds = array<i64: 8, 4>}]} {
    %c0 = arith.constant 0 : index
    %c0_0 = arith.constant 0 : index
    %0 = vector.load %arg1[%c0, %c0_0] : memref<8x32xf32, #tpu.memory_space<vmem>>, vector<8x32xf32>
    %1 = arith.truncf %0 : vector<8x32xf32> to vector<8x32xbf16>
    %c0_1 = arith.constant 0 : index
    %c0_2 = arith.constant 0 : index
    %2 = vector.load %arg3[%c0_1, %c0_2] : memref<32x640xbf16, #tpu.memory_space<vmem>>, vector<32x640xbf16>
    %cst = arith.constant dense<0.000000e+00> : vector<8x640xf32>
    %3 = tpu.matmul %1, %2, %cst {dimension_numbers = #tpu.dot_dimension_numbers<[1], [0], [0], [1], [0, 0, 1, 1], [], []>} : vector<8x32xbf16>, vector<32x640xbf16>, vector<8x640xf32> -> vector<8x640xf32>
    %c0_3 = arith.constant 0 : index
    %c0_4 = arith.constant 0 : index
    %4 = vector.load %arg2[%c0_3, %c0_4] : memref<1x640xf32, #tpu.memory_space<vmem>>, vector<1x640xf32>
    %5 = vector.broadcast %4 : vector<1x640xf32> to vector<8x640xf32>
    %6 = arith.addf %3, %5 : vector<8x640xf32>
    %cst_5 = arith.constant 0.000000e+00 : f32
    %7 = vector.broadcast %cst_5 : f32 to vector<8x640xf32>
    %8 = arith.maximumf %6, %7 : vector<8x640xf32>
    %9 = arith.truncf %8 : vector<8x640xf32> to vector<8x640xbf16>
    %c0_6 = arith.constant 0 : index
    %c0_7 = arith.constant 0 : index
    %10 = vector.load %arg4[%c0_6, %c0_7] : memref<640x4xbf16, #tpu.memory_space<vmem>>, vector<640x4xbf16>
    %cst_8 = arith.constant dense<0.000000e+00> : vector<8x4xf32>
    %11 = tpu.matmul %9, %10, %cst_8 {dimension_numbers = #tpu.dot_dimension_numbers<[1], [0], [0], [1], [0, 0, 1, 1], [], []>} : vector<8x640xbf16>, vector<640x4xbf16>, vector<8x4xf32> -> vector<8x4xf32>
    %c0_9 = arith.constant 0 : index
    %c0_10 = arith.constant 0 : index
    %12 = vector.load %arg5[%c0_9, %c0_10] : memref<8x4xf32, #tpu.memory_space<vmem>>, vector<8x4xf32>
    tpu.vector_store %arg5[%c0_9, %c0_10], %11 {strides = array<i32>} : memref<8x4xf32, #tpu.memory_space<vmem>>, vector<8x4xf32>,
    return
  }
  func.func @transform_0(%arg0: i32) -> (i32, i32) {
    %c0_i32 = arith.constant 0 : i32
    %c0_i32_0 = arith.constant 0 : i32
    return %arg0, %c0_i32 : i32, i32
  }
  func.func @transform_1(%arg0: i32) -> (i32, i32) {
    %c0_i32 = arith.constant 0 : i32
    %c0_i32_0 = arith.constant 0 : i32
    %c0_i32_1 = arith.constant 0 : i32
    return %c0_i32, %c0_i32_0 : i32, i32
  }
  func.func @transform_2(%arg0: i32) -> (i32, i32) {
    %c0_i32 = arith.constant 0 : i32
    %c0_i32_0 = arith.constant 0 : i32
    %c0_i32_1 = arith.constant 0 : i32
    return %c0_i32, %c0_i32_0 : i32, i32
  }
  func.func @transform_3(%arg0: i32) -> (i32, i32) {
    %c0_i32 = arith.constant 0 : i32
    %c0_i32_0 = arith.constant 0 : i32
    %c0_i32_1 = arith.constant 0 : i32
    return %c0_i32, %c0_i32_0 : i32, i32
  }
  func.func @transform_4(%arg0: i32) -> (i32, i32) {
    %c0_i32 = arith.constant 0 : i32
    %c0_i32_0 = arith.constant 0 : i32
    return %arg0, %c0_i32 : i32, i32
  }
}

</mosaic_0001>

<llo_original>
// kernel: tpu_custom_call.1
$region0: #{tpu_custom_call.1}
  #allocation0 [shape = 'u32[]', space=smem, size = 0x4, offset = 0x4, fixed_abs, tag = 'smem constant byte address 0x4 - core index']
  #allocation1 [shape = 'u32[144,128]{1,0:T(1,128)}', space=vmem, size = 0x12000, scoped, tag = 'internal scratch']
  %s0 = inlined_call_operand.vmem [shape: f32[16,32], index: 0, kind: input, shape index: {}]
  %s1 = inlined_call_operand.vmem [shape: f32[1,640], index: 1, kind: input, shape index: {}]
  %s2 = inlined_call_operand.vmem [shape: bf16[32,640], index: 2, kind: input, shape index: {}]
  %s3 = inlined_call_operand.vmem [shape: bf16[640,4], index: 3, kind: input, shape index: {}]
  %s4 = inlined_call_operand.vmem [shape: f32[16,4], index: 4, kind: output, shape index: {}]
  %s5 = sld [smem:[#allocation0]]
  $region49: #{tpu_custom_call.1} parent=0
    _
  %s7 = ssub.s32 1, %s5
  %s8 = scalar_select 0, %s7, %s5
  loop: start=0, step=1, limit=4
  $region2: #{tpu_custom_call.1} parent=0 // loop_pre_header
    _
  $region3: #{tpu_custom_call.1} parent=0 // loop_header
    %s10 = sphi 0, %s14
    %p11 = scmp.ge.s32.totalorder %s10, 4
    %s20 = sphi 0, %s22
    %s23 = sphi 0, %s20
    %s24 = sphi 0, %s23
    %s40 = sphi 0, %s24
    %s44 = sphi 0, %s44
    %s46 = sphi 0, %s44
    %s47 = sphi 0, %s46
    %s61 = sphi 0, %s47
    %s65 = sphi 0, %s65
    %s67 = sphi 0, %s65
    %s68 = sphi 0, %s67
    %s82 = sphi 0, %s68
    %s86 = sphi 0, %s86
    %s88 = sphi 0, %s86
    %s89 = sphi 0, %s88
    %s103 = sphi 0, %s89
    %s109 = sphi 0, %s111
    %s112 = sphi 0, %s109
    %s113 = sphi 0, %s112
    %s129 = sphi 0, %s113
  $region4: #{tpu_custom_call.1} parent=0 // loop_header_branch
    %13 = sbr.rel (%p11) target = $region8
  $region5: #{tpu_custom_call.1} parent=0 // loop_body
    %s15 = ssub.s32 %s10, 1
    %s16 = ssub.s32 %s10, 2
    %s17 = sadd.s32 %s10, 1
    %s18 = ssub.s32 %s10, %s17
    %p19 = scmp.eq.s32.totalorder %s18, 0
    %s21 = sadd.s32 %s20, 1
    %s22 = scalar_select %p19, %s20, %s21
    %p25 = pneg %p19
    %p26 = scmp.eq.s32.totalorder %s10, 1
    %p27 = por %p25, %p26
    %p28 = scmp.ne.s32.totalorder %s20, %s23
    %p29 = scmp.eq.s32.totalorder %s10, 0
    %p30 = por %p28, %p29
    %p31 = scmp.ne.s32.totalorder %s20, %s23
    %p32 = scmp.eq.s32.totalorder %s15, 1
    %p33 = por %p31, %p32
    %p34 = scmp.ne.s32.totalorder %s23, %s24
    %p35 = scmp.eq.s32.totalorder %s15, 0
    %p36 = por %p34, %p35
    %p37 = scmp.ne.s32.totalorder %s23, %s24
    %p38 = scmp.eq.s32.totalorder %s16, 1
    %p39 = por %p37, %p38
    %p41 = scmp.ne.s32.totalorder %s24, %s40
    %p42 = scmp.eq.s32.totalorder %s16, 0
    %p43 = por %p41, %p42
    %s45 = sadd.s32 %s44, 1
    %p48 = scmp.eq.s32.totalorder %s10, 1
    %p49 = scmp.ne.s32.totalorder %s44, %s46
    %p50 = scmp.eq.s32.totalorder %s10, 0
    %p51 = por %p49, %p50
    %p52 = scmp.ne.s32.totalorder %s44, %s46
    %p53 = scmp.eq.s32.totalorder %s15, 1
    %p54 = por %p52, %p53
    %p55 = scmp.ne.s32.totalorder %s46, %s47
    %p56 = scmp.eq.s32.totalorder %s15, 0
    %p57 = por %p55, %p56
    %p58 = scmp.ne.s32.totalorder %s46, %s47
    %p59 = scmp.eq.s32.totalorder %s16, 1
    %p60 = por %p58, %p59
    %p62 = scmp.ne.s32.totalorder %s47, %s61
    %p63 = scmp.eq.s32.totalorder %s16, 0
    %p64 = por %p62, %p63
    %s66 = sadd.s32 %s65, 1
    %p69 = scmp.eq.s32.totalorder %s10, 1
    %p70 = scmp.ne.s32.totalorder %s65, %s67
    %p71 = scmp.eq.s32.totalorder %s10, 0
    %p72 = por %p70, %p71
    %p73 = scmp.ne.s32.totalorder %s65, %s67
    %p74 = scmp.eq.s32.totalorder %s15, 1
    %p75 = por %p73, %p74
    %p76 = scmp.ne.s32.totalorder %s67, %s68
    %p77 = scmp.eq.s32.totalorder %s15, 0
    %p78 = por %p76, %p77
    %p79 = scmp.ne.s32.totalorder %s67, %s68
    %p80 = scmp.eq.s32.totalorder %s16, 1
    %p81 = por %p79, %p80
    %p83 = scmp.ne.s32.totalorder %s68, %s82
    %p84 = scmp.eq.s32.totalorder %s16, 0
    %p85 = por %p83, %p84
    %s87 = sadd.s32 %s86, 1
    %p90 = scmp.eq.s32.totalorder %s10, 1
    %p91 = scmp.ne.s32.totalorder %s86, %s88
    %p92 = scmp.eq.s32.totalorder %s10, 0
    %p93 = por %p91, %p92
    %p94 = scmp.ne.s32.totalorder %s86, %s88
    %p95 = scmp.eq.s32.totalorder %s15, 1
    %p96 = por %p94, %p95
    %p97 = scmp.ne.s32.totalorder %s88, %s89
    %p98 = scmp.eq.s32.totalorder %s15, 0
    %p99 = por %p97, %p98
    %p100 = scmp.ne.s32.totalorder %s88, %s89
    %p101 = scmp.eq.s32.totalorder %s16, 1
    %p102 = por %p100, %p101
    %p104 = scmp.ne.s32.totalorder %s89, %s103
    %p105 = scmp.eq.s32.totalorder %s16, 0
    %p106 = por %p104, %p105
    %s107 = ssub.s32 %s10, %s17
    %p108 = scmp.eq.s32.totalorder %s107, 0
    %s110 = sadd.s32 %s109, 1
    %s111 = scalar_select %p108, %s109, %s110
    %p114 = pneg %p108
    %p115 = scmp.eq.s32.totalorder %s10, 1
    %p116 = por %p114, %p115
    %p117 = scmp.ne.s32.totalorder %s109, %s112
    %p118 = scmp.eq.s32.totalorder %s10, 0
    %p119 = por %p117, %p118
    %p120 = scmp.ne.s32.totalorder %s109, %s112
    %p121 = scmp.eq.s32.totalorder %s15, 1
    %p122 = por %p120, %p121
    %p123 = scmp.ne.s32.totalorder %s112, %s113
    %p124 = scmp.eq.s32.totalorder %s15, 0
    %p125 = por %p123, %p124
    %p126 = scmp.ne.s32.totalorder %s112, %s113
    %p127 = scmp.eq.s32.totalorder %s16, 1
    %p128 = por %p126, %p127
    %p130 = scmp.ne.s32.totalorder %s113, %s129
    %p131 = scmp.eq.s32.totalorder %s16, 0
    %p132 = por %p130, %p131
    %p133 = scmp.le.s32.totalorder 1, %s10
    %p134 = scmp.lt.s32.totalorder %s10, 3
    %p135 = pnand %p133, %p134
    %p136 = pneg %p135
    // Predicated region
    $region9: #{tpu_custom_call.1} parent=5 // pred_check
      _
    $region10: #{tpu_custom_call.1} parent=5 // pred_check_branch
      %138 = sbr.rel (%p135) target = $region12
    $region11: #{tpu_custom_call.1} parent=5 // pred_region
      %s139 = ssub.s32 %s10, 1
      // Predicated region
      $region13: #{tpu_custom_call.1} parent=11 // pred_check
        %p140 = pneg %p57
      $region14: #{tpu_custom_call.1} parent=11 // pred_check_branch
        %142 = sbr.rel (%p140) target = $region16
      $region15: #{tpu_custom_call.1} parent=11 // pred_region
        _
      $region16: #{tpu_custom_call.1} parent=11 // pred_fallthru
        _
      // Predicated region
      $region17: #{tpu_custom_call.1} parent=11 // pred_check
        %p143 = pneg %p78
      $region18: #{tpu_custom_call.1} parent=11 // pred_check_branch
        %145 = sbr.rel (%p143) target = $region20
      $region19: #{tpu_custom_call.1} parent=11 // pred_region
        _
      $region20: #{tpu_custom_call.1} parent=11 // pred_fallthru
        _
      // Predicated region
      $region21: #{tpu_custom_call.1} parent=11 // pred_check
        %p146 = pneg %p99
      $region22: #{tpu_custom_call.1} parent=11 // pred_check_branch
        %148 = sbr.rel (%p146) target = $region24
      $region23: #{tpu_custom_call.1} parent=11 // pred_region
        _
      $region24: #{tpu_custom_call.1} parent=11 // pred_fallthru
        _
    $region12: #{tpu_custom_call.1} parent=5 // pred_fallthru
      _
    %p149 = scmp.lt.s32.totalorder %s10, 2
    // Predicated region
    $region25: #{tpu_custom_call.1} parent=5 // pred_check
      %p150 = pneg %p149
    $region26: #{tpu_custom_call.1} parent=5 // pred_check_branch
      %152 = sbr.rel (%p150) target = $region28
    $region27: #{tpu_custom_call.1} parent=5 // pred_region
      // Predicated region
      $region29: #{tpu_custom_call.1} parent=27 // pred_check
        %p153 = pneg %p30
      $region30: #{tpu_custom_call.1} parent=27 // pred_check_branch
        %155 = sbr.rel (%p153) target = $region32
      $region31: #{tpu_custom_call.1} parent=27 // pred_region
        %p156 = scmp.lt.s32.totalorder %s10, 1
        %s157 = scalar_select %p156, %s10, 1
        %s158 = smul.addr %s157, 8
        %s159 = scalar_lea.vmem %s0, %s158
      $region32: #{tpu_custom_call.1} parent=27 // pred_fallthru
        _
    $region28: #{tpu_custom_call.1} parent=5 // pred_fallthru
      _
    %p160 = scmp.le.s32.totalorder 1, %s10
    %p161 = scmp.lt.s32.totalorder %s10, 3
    %p162 = pnand %p160, %p161
    %p163 = pneg %p162
    // Predicated region
    $region33: #{tpu_custom_call.1} parent=5 // pred_check
      _
    $region34: #{tpu_custom_call.1} parent=5 // pred_check_branch
      %165 = sbr.rel (%p162) target = $region36
    $region35: #{tpu_custom_call.1} parent=5 // pred_region
      %s166 = ssub.s32 %s10, 1
      %p167 = scmp.lt.s32.totalorder %s15, 1
      %s168 = scalar_select %p167, %s15, 1
      %s169 = smul.addr %s168, 8
      %s170 = scalar_lea.vmem %s0, %s169
      %p171 = pneg %p36
      %p172 = pneg %p33
      %p173 = pneg %p57
      %p174 = pneg %p54
      %p175 = pneg %p78
      %p176 = pneg %p75
      %p177 = pneg %p99
      %p178 = pneg %p96
      %p179 = pneg %p125
      %p180 = pneg %p122
      %p181 = scmp.lt.s32.totalorder %s15, 1
      %s182 = scalar_select %p181, %s15, 1
      %s183 = smul.addr %s182, 8
      %s184 = scalar_lea.vmem %s4, %s183
      %p185 = scmp.lt.s32.totalorder %s15, 1
      %s186 = scalar_select %p185, %s15, 1
      %s187 = smul.addr %s186, 8
      %s188 = scalar_lea.vmem %s0, %s187
      %p189 = scmp.lt.s32.totalorder %s15, 1
      %s190 = scalar_select %p189, %s15, 1
      %s191 = smul.addr %s190, 8
      %s192 = scalar_lea.vmem %s4, %s191
      %v194 = vld [vmem:[%s188] sm:$0xff]
      %v195 = vpack.c.bf16 %v194, %v194
      %v196 = vld [vmem:[%s2] sm:$0xff]
      %v197 = vld [vmem:[%s2 + $0x8] sm:$0xff]
      %v198 = vld [vmem:[%s2 + $0x10] sm:$0xf]
      %v199 = vld [vmem:[%s2 + $0x14] sm:$0xff]
      %v200 = vld [vmem:[%s2 + $0x1c] sm:$0xff]
      %v201 = vld [vmem:[%s2 + $0x24] sm:$0xf]
      %v202 = vld [vmem:[%s2 + $0x28] sm:$0xff]
      %v203 = vld [vmem:[%s2 + $0x30] sm:$0xff]
      %v204 = vld [vmem:[%s2 + $0x38] sm:$0xf]
      %v205 = vld [vmem:[%s2 + $0x3c] sm:$0xff]
      %v206 = vld [vmem:[%s2 + $0x44] sm:$0xff]
      %v207 = vld [vmem:[%s2 + $0x4c] sm:$0xf]
      %v208 = vld [vmem:[%s1] sm:$0x1f]
      %v210 = vlaneseq
      %v211 = vshrl.u32 %v210, 7
      %v212 = vsub.s32 0, %v211
      %v213 = vrot.slane %v208, %v212
      %v214 = vlaneseq
      %v215 = vshrl.u32 %v214, 7
      %v216 = vsub.s32 1, %v215
      %v217 = vrot.slane %v208, %v216
      %v218 = vlaneseq
      %v219 = vshrl.u32 %v218, 7
      %v220 = vsub.s32 2, %v219
      %v221 = vrot.slane %v208, %v220
      %v222 = vlaneseq
      %v223 = vshrl.u32 %v222, 7
      %v224 = vsub.s32 3, %v223
      %v225 = vrot.slane %v208, %v224
      %v226 = vlaneseq
      %v227 = vshrl.u32 %v226, 7
      %v228 = vsub.s32 4, %v227
      %v229 = vrot.slane %v208, %v228
      %v247 = vunpack.c.l.b16 %v196
      %v248 = vunpack.c.h.b16 %v196
      %v249 = vunpack.c.l.b16 %v197
      %v250 = vunpack.c.h.b16 %v197
      %v251 = vunpack.c.l.b16 %v198
      %v252 = vunpack.c.l.b16 %v199
      %v253 = vunpack.c.h.b16 %v199
      %v254 = vunpack.c.l.b16 %v200
      %v255 = vunpack.c.h.b16 %v200
      %v256 = vunpack.c.l.b16 %v201
      %v257 = vunpack.c.l.b16 %v202
      %v258 = vunpack.c.h.b16 %v202
      %v259 = vunpack.c.l.b16 %v203
      %v260 = vunpack.c.h.b16 %v203
      %v261 = vunpack.c.l.b16 %v204
      %v262 = vunpack.c.l.b16 %v205
      %v263 = vunpack.c.h.b16 %v205
      %v264 = vunpack.c.l.b16 %v206
      %v265 = vunpack.c.h.b16 %v206
      %v266 = vunpack.c.l.b16 %v207
      %v267 = vpack.c.b16 %v252, %v247
      %v268 = vpack.c.b16 %v253, %v248
      %v269 = vpack.c.b16 %v254, %v249
      %v270 = vpack.c.b16 %v255, %v250
      %v271 = vpack.c.b16 %v256, %v251
      %v272 = vpack.c.b16 %v262, %v257
      %v273 = vpack.c.b16 %v263, %v258
      %v274 = vpack.c.b16 %v264, %v259
      %v275 = vpack.c.b16 %v265, %v260
      %v276 = vpack.c.b16 %v266, %v261
      %vm287 = vcmask 261120
      %v289 = vsel %vm287, %v195, 0
      %291 = vmatprep.subr.bf16.mxu0 %v268
      %292 = vmatpush1.bf16.msra.mxu0 %v267
      %293 = vmatprep.subr.bf16.mxu0 %v273
      %294 = vmatpush1.bf16.msra.mxu0 %v272
      %295 = vmatprep.subr.bf16.mxu0 0
      %296 = vmatpush1.bf16.msra.mxu0 0
      %297 = vmatprep.subr.bf16.mxu0 0
      %298 = vmatpush1.bf16.msra.mxu0 0
      %299 = vmatprep.subr.bf16.mxu0 0
      %300 = vmatpush1.bf16.msra.mxu0 0
      %301 = vmatprep.subr.bf16.mxu0 0
      %302 = vmatpush1.bf16.msra.mxu0 0
      %303 = vmatprep.subr.bf16.mxu0 0
      %304 = vmatpush1.bf16.msra.mxu0 0
      %305 = vmatprep.subr.bf16.mxu0 0
      %306 = vmatpush1.bf16.msra.mxu0 0
      %307 = vmatprep.subr.bf16.mxu0 0
      %308 = vmatpush1.bf16.msra.mxu0 0
      %309 = vmatprep.subr.bf16.mxu0 0
      %310 = vmatpush1.bf16.msra.mxu0 0
      %311 = vmatprep.subr.bf16.mxu0 0
      %312 = vmatpush1.bf16.msra.mxu0 0
      %313 = vmatprep.subr.bf16.mxu0 0
      %314 = vmatpush1.bf16.msra.mxu0 0
      %315 = vmatprep.subr.bf16.mxu0 0
      %316 = vmatpush1.bf16.msra.mxu0 0
      %317 = vmatprep.subr.bf16.mxu0 0
      %318 = vmatpush1.bf16.msra.mxu0 0
      %319 = vmatprep.subr.bf16.mxu0 0
      %320 = vmatpush1.bf16.msra.mxu0 0
      %321 = vmatprep.subr.bf16.mxu0 0
      %322 = vmatpush1.bf16.msra.mxu0 0
      %323 = vmatprep.mubr.bf16.mxu0 0
      %324 = vmatmul.mubr.bf16.gmra.mrb[0].mxu0 %v289
      %v325 = vpop.f32.mrb[0].mxu0
      %v326 = vadd.f32 %v213, %v325
      %v327 = vpop.f32.mrb[0].mxu0
      %v328 = vadd.f32 %v217, %v327
      %v329 = vpop.f32.mrb[0].mxu0
      %v330 = vpop.f32.mrb[0].mxu0
      %331 = vdwg.mxu0
      %332 = vmatprep.subr.bf16.mxu0 %v270
      %333 = vmatpush1.bf16.msra.mxu0 %v269
      %334 = vmatprep.subr.bf16.mxu0 %v275
      %335 = vmatpush1.bf16.msra.mxu0 %v274
      %336 = vmatprep.subr.bf16.mxu0 0
      %337 = vmatpush1.bf16.msra.mxu0 0
      %338 = vmatprep.subr.bf16.mxu0 0
      %339 = vmatpush1.bf16.msra.mxu0 0
      %340 = vmatprep.subr.bf16.mxu0 0
      %341 = vmatpush1.bf16.msra.mxu0 0
      %342 = vmatprep.subr.bf16.mxu0 0
      %343 = vmatpush1.bf16.msra.mxu0 0
      %344 = vmatprep.subr.bf16.mxu0 0
      %345 = vmatpush1.bf16.msra.mxu0 0
      %346 = vmatprep.subr.bf16.mxu0 0
      %347 = vmatpush1.bf16.msra.mxu0 0
      %348 = vmatprep.subr.bf16.mxu0 0
      %349 = vmatpush1.bf16.msra.mxu0 0
      %350 = vmatprep.subr.bf16.mxu0 0
      %351 = vmatpush1.bf16.msra.mxu0 0
      %352 = vmatprep.subr.bf16.mxu0 0
      %353 = vmatpush1.bf16.msra.mxu0 0
      %354 = vmatprep.subr.bf16.mxu0 0
      %355 = vmatpush1.bf16.msra.mxu0 0
      %356 = vmatprep.subr.bf16.mxu0 0
      %357 = vmatpush1.bf16.msra.mxu0 0
      %358 = vmatprep.subr.bf16.mxu0 0
      %359 = vmatpush1.bf16.msra.mxu0 0
      %360 = vmatprep.subr.bf16.mxu0 0
      %361 = vmatpush1.bf16.msra.mxu0 0
      %362 = vmatprep.subr.bf16.mxu0 0
      %363 = vmatpush1.bf16.msra.mxu0 0
      %364 = vmatprep.mubr.bf16.mxu0 0
      %365 = vmatmul.mubr.bf16.gmra.mrb[0].mxu0 %v289
      %v366 = vpop.f32.mrb[0].mxu0
      %v367 = vadd.f32 %v221, %v366
      %v368 = vpop.f32.mrb[0].mxu0
      %v369 = vadd.f32 %v225, %v368
      %v370 = vpop.f32.mrb[0].mxu0
      %v371 = vpop.f32.mrb[0].mxu0
      %372 = vdwg.mxu0
      %373 = vmatprep.subr.bf16.mxu0 0
      %374 = vmatpush1.bf16.msra.mxu0 %v271
      %375 = vmatprep.subr.bf16.mxu0 0
      %376 = vmatpush1.bf16.msra.mxu0 %v276
      %377 = vmatprep.subr.bf16.mxu0 0
      %378 = vmatpush1.bf16.msra.mxu0 0
      %379 = vmatprep.subr.bf16.mxu0 0
      %380 = vmatpush1.bf16.msra.mxu0 0
      %381 = vmatprep.subr.bf16.mxu0 0
      %382 = vmatpush1.bf16.msra.mxu0 0
      %383 = vmatprep.subr.bf16.mxu0 0
      %384 = vmatpush1.bf16.msra.mxu0 0
      %385 = vmatprep.subr.bf16.mxu0 0
      %386 = vmatpush1.bf16.msra.mxu0 0
      %387 = vmatprep.subr.bf16.mxu0 0
      %388 = vmatpush1.bf16.msra.mxu0 0
      %389 = vmatprep.subr.bf16.mxu0 0
      %390 = vmatpush1.bf16.msra.mxu0 0
      %391 = vmatprep.subr.bf16.mxu0 0
      %392 = vmatpush1.bf16.msra.mxu0 0
      %393 = vmatprep.subr.bf16.mxu0 0
      %394 = vmatpush1.bf16.msra.mxu0 0
      %395 = vmatprep.subr.bf16.mxu0 0
      %396 = vmatpush1.bf16.msra.mxu0 0
      %397 = vmatprep.subr.bf16.mxu0 0
      %398 = vmatpush1.bf16.msra.mxu0 0
      %399 = vmatprep.subr.bf16.mxu0 0
      %400 = vmatpush1.bf16.msra.mxu0 0
      %401 = vmatprep.subr.bf16.mxu0 0
      %402 = vmatpush1.bf16.msra.mxu0 0
      %403 = vmatprep.subr.bf16.mxu0 0
      %404 = vmatpush1.bf16.msra.mxu0 0
      %405 = vmatprep.mubr.bf16.mxu0 0
      %406 = vmatmul.mubr.bf16.gmra.mrb[0].mxu0 %v289
      %v407 = vpop.f32.mrb[0].mxu0
      %v408 = vadd.f32 %v229, %v407
      %v409 = vpop.f32.mrb[0].mxu0
      %v410 = vpop.f32.mrb[0].mxu0
      %v411 = vpop.f32.mrb[0].mxu0
      %412 = vdwg.mxu0
      %v413 = vmax.f32 %v326, 0.0
      %v414 = vmax.f32 %v328, 0.0
      %v415 = vmax.f32 %v367, 0.0
      %v416 = vmax.f32 %v369, 0.0
      %v417 = vmax.f32 %v408, 0.0
      %v418 = vpack.c.bf16 %v413, %v413
      %v419 = vpack.c.bf16 %v414, %v414
      %v420 = vpack.c.bf16 %v415, %v415
      %v421 = vpack.c.bf16 %v416, %v416
      %v422 = vpack.c.bf16 %v417, %v417
      %v423 = vld [vmem:[%s3] sm:$0xf]
      %v424 = vld [vmem:[%s3 + $0x4] sm:$0xf]
      %v425 = vld [vmem:[%s3 + $0x8] sm:$0xf]
      %v426 = vld [vmem:[%s3 + $0xc] sm:$0xf]
      %v427 = vld [vmem:[%s3 + $0x10] sm:$0xf]
      %v428 = vld [vmem:[%s3 + $0x14] sm:$0xf]
      %v429 = vld [vmem:[%s3 + $0x18] sm:$0xf]
      %v430 = vld [vmem:[%s3 + $0x1c] sm:$0xf]
      %v431 = vld [vmem:[%s3 + $0x20] sm:$0xf]
      %v432 = vld [vmem:[%s3 + $0x24] sm:$0xf]
      %v433 = vld [vmem:[%s3 + $0x28] sm:$0xf]
      %v434 = vld [vmem:[%s3 + $0x2c] sm:$0xf]
      %v435 = vld [vmem:[%s3 + $0x30] sm:$0xf]
      %v436 = vld [vmem:[%s3 + $0x34] sm:$0xf]
      %v437 = vld [vmem:[%s3 + $0x38] sm:$0xf]
      %v438 = vld [vmem:[%s3 + $0x3c] sm:$0xf]
      %v439 = vld [vmem:[%s3 + $0x40] sm:$0xf]
      %v440 = vld [vmem:[%s3 + $0x44] sm:$0xf]
      %v441 = vld [vmem:[%s3 + $0x48] sm:$0xf]
      %v442 = vld [vmem:[%s3 + $0x4c] sm:$0xf]
      %v443 = vld [vmem:[%s3 + $0x50] sm:$0xf]
      %v444 = vld [vmem:[%s3 + $0x54] sm:$0xf]
      %v445 = vld [vmem:[%s3 + $0x58] sm:$0xf]
      %v446 = vld [vmem:[%s3 + $0x5c] sm:$0xf]
      %v447 = vld [vmem:[%s3 + $0x60] sm:$0xf]
      %v448 = vld [vmem:[%s3 + $0x64] sm:$0xf]
      %v449 = vld [vmem:[%s3 + $0x68] sm:$0xf]
      %v450 = vld [vmem:[%s3 + $0x6c] sm:$0xf]
      %v451 = vld [vmem:[%s3 + $0x70] sm:$0xf]
      %v452 = vld [vmem:[%s3 + $0x74] sm:$0xf]
      %v453 = vld [vmem:[%s3 + $0x78] sm:$0xf]
      %v454 = vld [vmem:[%s3 + $0x7c] sm:$0xf]
      %v455 = vld [vmem:[%s3 + $0x80] sm:$0xf]
      %v456 = vld [vmem:[%s3 + $0x84] sm:$0xf]
      %v457 = vld [vmem:[%s3 + $0x88] sm:$0xf]
      %v458 = vld [vmem:[%s3 + $0x8c] sm:$0xf]
      %v459 = vld [vmem:[%s3 + $0x90] sm:$0xf]
      %v460 = vld [vmem:[%s3 + $0x94] sm:$0xf]
      %v461 = vld [vmem:[%s3 + $0x98] sm:$0xf]
      %v462 = vld [vmem:[%s3 + $0x9c] sm:$0xf]
      %v463 = vld [vmem:[%s3 + $0xa0] sm:$0xf]
      %v464 = vld [vmem:[%s3 + $0xa4] sm:$0xf]
      %v465 = vld [vmem:[%s3 + $0xa8] sm:$0xf]
      %v466 = vld [vmem:[%s3 + $0xac] sm:$0xf]
      %v467 = vld [vmem:[%s3 + $0xb0] sm:$0xf]
      %v468 = vld [vmem:[%s3 + $0xb4] sm:$0xf]
      %v469 = vld [vmem:[%s3 + $0xb8] sm:$0xf]
      %v470 = vld [vmem:[%s3 + $0xbc] sm:$0xf]
      %v471 = vld [vmem:[%s3 + $0xc0] sm:$0xf]
      %v472 = vld [vmem:[%s3 + $0xc4] sm:$0xf]
      %v473 = vld [vmem:[%s3 + $0xc8] sm:$0xf]
      %v474 = vld [vmem:[%s3 + $0xcc] sm:$0xf]
      %v475 = vld [vmem:[%s3 + $0xd0] sm:$0xf]
      %v476 = vld [vmem:[%s3 + $0xd4] sm:$0xf]
      %v477 = vld [vmem:[%s3 + $0xd8] sm:$0xf]
      %v478 = vld [vmem:[%s3 + $0xdc] sm:$0xf]
      %v479 = vld [vmem:[%s3 + $0xe0] sm:$0xf]
      %v480 = vld [vmem:[%s3 + $0xe4] sm:$0xf]
      %v481 = vld [vmem:[%s3 + $0xe8] sm:$0xf]
      %v482 = vld [vmem:[%s3 + $0xec] sm:$0xf]
      %v483 = vld [vmem:[%s3 + $0xf0] sm:$0xf]
      %v484 = vld [vmem:[%s3 + $0xf4] sm:$0xf]
      %v485 = vld [vmem:[%s3 + $0xf8] sm:$0xf]
      %v486 = vld [vmem:[%s3 + $0xfc] sm:$0xf]
      %v487 = vld [vmem:[%s3 + $0x100] sm:$0xf]
      %v488 = vld [vmem:[%s3 + $0x104] sm:$0xf]
      %v489 = vld [vmem:[%s3 + $0x108] sm:$0xf]
      %v490 = vld [vmem:[%s3 + $0x10c] sm:$0xf]
      %v491 = vld [vmem:[%s3 + $0x110] sm:$0xf]
      %v492 = vld [vmem:[%s3 + $0x114] sm:$0xf]
      %v493 = vld [vmem:[%s3 + $0x118] sm:$0xf]
      %v494 = vld [vmem:[%s3 + $0x11c] sm:$0xf]
      %v495 = vld [vmem:[%s3 + $0x120] sm:$0xf]
      %v496 = vld [vmem:[%s3 + $0x124] sm:$0xf]
      %v497 = vld [vmem:[%s3 + $0x128] sm:$0xf]
      %v498 = vld [vmem:[%s3 + $0x12c] sm:$0xf]
      %v499 = vld [vmem:[%s3 + $0x130] sm:$0xf]
      %v500 = vld [vmem:[%s3 + $0x134] sm:$0xf]
      %v501 = vld [vmem:[%s3 + $0x138] sm:$0xf]
      %v502 = vld [vmem:[%s3 + $0x13c] sm:$0xf]
      %v583 = vunpack.c.l.b16 %v423
      %v584 = vunpack.c.l.b16 %v424
      %v585 = vunpack.c.l.b16 %v425
      %v586 = vunpack.c.l.b16 %v426
      %v587 = vunpack.c.l.b16 %v427
      %v588 = vunpack.c.l.b16 %v428
      %v589 = vunpack.c.l.b16 %v429
      %v590 = vunpack.c.l.b16 %v430
      %v591 = vunpack.c.l.b16 %v431
      %v592 = vunpack.c.l.b16 %v432
      %v593 = vunpack.c.l.b16 %v433
      %v594 = vunpack.c.l.b16 %v434
      %v595 = vunpack.c.l.b16 %v435
      %v596 = vunpack.c.l.b16 %v436
      %v597 = vunpack.c.l.b16 %v437
      %v598 = vunpack.c.l.b16 %v438
      %v599 = vunpack.c.l.b16 %v439
      %v600 = vunpack.c.l.b16 %v440
      %v601 = vunpack.c.l.b16 %v441
      %v602 = vunpack.c.l.b16 %v442
      %v603 = vunpack.c.l.b16 %v443
      %v604 = vunpack.c.l.b16 %v444
      %v605 = vunpack.c.l.b16 %v445
      %v606 = vunpack.c.l.b16 %v446
      %v607 = vunpack.c.l.b16 %v447
      %v608 = vunpack.c.l.b16 %v448
      %v609 = vunpack.c.l.b16 %v449
      %v610 = vunpack.c.l.b16 %v450
      %v611 = vunpack.c.l.b16 %v451
      %v612 = vunpack.c.l.b16 %v452
      %v613 = vunpack.c.l.b16 %v453
      %v614 = vunpack.c.l.b16 %v454
      %v615 = vunpack.c.l.b16 %v455
      %v616 = vunpack.c.l.b16 %v456
      %v617 = vunpack.c.l.b16 %v457
      %v618 = vunpack.c.l.b16 %v458
      %v619 = vunpack.c.l.b16 %v459
      %v620 = vunpack.c.l.b16 %v460
      %v621 = vunpack.c.l.b16 %v461
      %v622 = vunpack.c.l.b16 %v462
      %v623 = vunpack.c.l.b16 %v463
      %v624 = vunpack.c.l.b16 %v464
      %v625 = vunpack.c.l.b16 %v465
      %v626 = vunpack.c.l.b16 %v466
      %v627 = vunpack.c.l.b16 %v467
      %v628 = vunpack.c.l.b16 %v468
      %v629 = vunpack.c.l.b16 %v469
      %v630 = vunpack.c.l.b16 %v470
      %v631 = vunpack.c.l.b16 %v471
      %v632 = vunpack.c.l.b16 %v472
      %v633 = vunpack.c.l.b16 %v473
      %v634 = vunpack.c.l.b16 %v474
      %v635 = vunpack.c.l.b16 %v475
      %v636 = vunpack.c.l.b16 %v476
      %v637 = vunpack.c.l.b16 %v477
      %v638 = vunpack.c.l.b16 %v478
      %v639 = vunpack.c.l.b16 %v479
      %v640 = vunpack.c.l.b16 %v480
      %v641 = vunpack.c.l.b16 %v481
      %v642 = vunpack.c.l.b16 %v482
      %v643 = vunpack.c.l.b16 %v483
      %v644 = vunpack.c.l.b16 %v484
      %v645 = vunpack.c.l.b16 %v485
      %v646 = vunpack.c.l.b16 %v486
      %v647 = vunpack.c.l.b16 %v487
      %v648 = vunpack.c.l.b16 %v488
      %v649 = vunpack.c.l.b16 %v489
      %v650 = vunpack.c.l.b16 %v490
      %v651 = vunpack.c.l.b16 %v491
      %v652 = vunpack.c.l.b16 %v492
      %v653 = vunpack.c.l.b16 %v493
      %v654 = vunpack.c.l.b16 %v494
      %v655 = vunpack.c.l.b16 %v495
      %v656 = vunpack.c.l.b16 %v496
      %v657 = vunpack.c.l.b16 %v497
      %v658 = vunpack.c.l.b16 %v498
      %v659 = vunpack.c.l.b16 %v499
      %v660 = vunpack.c.l.b16 %v500
      %v661 = vunpack.c.l.b16 %v501
      %v662 = vunpack.c.l.b16 %v502
      %v663 = vpack.c.b16 %v584, %v583
      %v664 = vpack.c.b16 %v586, %v585
      %v665 = vpack.c.b16 %v588, %v587
      %v666 = vpack.c.b16 %v590, %v589
      %v667 = vpack.c.b16 %v592, %v591
      %v668 = vpack.c.b16 %v594, %v593
      %v669 = vpack.c.b16 %v596, %v595
      %v670 = vpack.c.b16 %v598, %v597
      %v671 = vpack.c.b16 %v600, %v599
      %v672 = vpack.c.b16 %v602, %v601
      %v673 = vpack.c.b16 %v604, %v603
      %v674 = vpack.c.b16 %v606, %v605
      %v675 = vpack.c.b16 %v608, %v607
      %v676 = vpack.c.b16 %v610, %v609
      %v677 = vpack.c.b16 %v612, %v611
      %v678 = vpack.c.b16 %v614, %v613
      %v679 = vpack.c.b16 %v616, %v615
      %v680 = vpack.c.b16 %v618, %v617
      %v681 = vpack.c.b16 %v620, %v619
      %v682 = vpack.c.b16 %v622, %v621
      %v683 = vpack.c.b16 %v624, %v623
      %v684 = vpack.c.b16 %v626, %v625
      %v685 = vpack.c.b16 %v628, %v627
      %v686 = vpack.c.b16 %v630, %v629
      %v687 = vpack.c.b16 %v632, %v631
      %v688 = vpack.c.b16 %v634, %v633
      %v689 = vpack.c.b16 %v636, %v635
      %v690 = vpack.c.b16 %v638, %v637
      %v691 = vpack.c.b16 %v640, %v639
      %v692 = vpack.c.b16 %v642, %v641
      %v693 = vpack.c.b16 %v644, %v643
      %v694 = vpack.c.b16 %v646, %v645
      %v695 = vpack.c.b16 %v648, %v647
      %v696 = vpack.c.b16 %v650, %v649
      %v697 = vpack.c.b16 %v652, %v651
      %v698 = vpack.c.b16 %v654, %v653
      %v699 = vpack.c.b16 %v656, %v655
      %v700 = vpack.c.b16 %v658, %v657
      %v701 = vpack.c.b16 %v660, %v659
      %v702 = vpack.c.b16 %v662, %v661
      %743 = vmatprep.subr.bf16.mxu0 0
      %744 = vmatpush1.bf16.msra.mxu0 %v663
      %745 = vmatprep.subr.bf16.mxu0 0
      %746 = vmatpush1.bf16.msra.mxu0 %v664
      %747 = vmatprep.subr.bf16.mxu0 0
      %748 = vmatpush1.bf16.msra.mxu0 %v665
      %749 = vmatprep.subr.bf16.mxu0 0
      %750 = vmatpush1.bf16.msra.mxu0 %v666
      %751 = vmatprep.subr.bf16.mxu0 0
      %752 = vmatpush1.bf16.msra.mxu0 %v667
      %753 = vmatprep.subr.bf16.mxu0 0
      %754 = vmatpush1.bf16.msra.mxu0 %v668
      %755 = vmatprep.subr.bf16.mxu0 0
      %756 = vmatpush1.bf16.msra.mxu0 %v669
      %757 = vmatprep.subr.bf16.mxu0 0
      %758 = vmatpush1.bf16.msra.mxu0 %v670
      %759 = vmatprep.subr.bf16.mxu0 0
      %760 = vmatpush1.bf16.msra.mxu0 %v671
      %761 = vmatprep.subr.bf16.mxu0 0
      %762 = vmatpush1.bf16.msra.mxu0 %v672
      %763 = vmatprep.subr.bf16.mxu0 0
      %764 = vmatpush1.bf16.msra.mxu0 %v673
      %765 = vmatprep.subr.bf16.mxu0 0
      %766 = vmatpush1.bf16.msra.mxu0 %v674
      %767 = vmatprep.subr.bf16.mxu0 0
      %768 = vmatpush1.bf16.msra.mxu0 %v675
      %769 = vmatprep.subr.bf16.mxu0 0
      %770 = vmatpush1.bf16.msra.mxu0 %v676
      %771 = vmatprep.subr.bf16.mxu0 0
      %772 = vmatpush1.bf16.msra.mxu0 %v677
      %773 = vmatprep.subr.bf16.mxu0 0
      %774 = vmatpush1.bf16.msra.mxu0 %v678
      %775 = vmatprep.mubr.bf16.mxu0 %v419
      %776 = vmatmul.mubr.bf16.gmra.mrb[0].mxu0 %v418
      %v777 = vpop.f32.mrb[0].mxu0
      %v778 = vadd.f32 0.0, %v777
      %v779 = vpop.f32.mrb[0].mxu0
      %v780 = vpop.f32.mrb[0].mxu0
      %v781 = vpop.f32.mrb[0].mxu0
      %782 = vdwg.mxu0
      %783 = vmatprep.subr.bf16.mxu0 0
      %784 = vmatpush1.bf16.msra.mxu0 %v679
      %785 = vmatprep.subr.bf16.mxu0 0
      %786 = vmatpush1.bf16.msra.mxu0 %v680
      %787 = vmatprep.subr.bf16.mxu0 0
      %788 = vmatpush1.bf16.msra.mxu0 %v681
      %789 = vmatprep.subr.bf16.mxu0 0
      %790 = vmatpush1.bf16.msra.mxu0 %v682
      %791 = vmatprep.subr.bf16.mxu0 0
      %792 = vmatpush1.bf16.msra.mxu0 %v683
      %793 = vmatprep.subr.bf16.mxu0 0
      %794 = vmatpush1.bf16.msra.mxu0 %v684
      %795 = vmatprep.subr.bf16.mxu0 0
      %796 = vmatpush1.bf16.msra.mxu0 %v685
      %797 = vmatprep.subr.bf16.mxu0 0
      %798 = vmatpush1.bf16.msra.mxu0 %v686
      %799 = vmatprep.subr.bf16.mxu0 0
      %800 = vmatpush1.bf16.msra.mxu0 %v687
      %801 = vmatprep.subr.bf16.mxu0 0
      %802 = vmatpush1.bf16.msra.mxu0 %v688
      %803 = vmatprep.subr.bf16.mxu0 0
      %804 = vmatpush1.bf16.msra.mxu0 %v689
      %805 = vmatprep.subr.bf16.mxu0 0
      %806 = vmatpush1.bf16.msra.mxu0 %v690
      %807 = vmatprep.subr.bf16.mxu0 0
      %808 = vmatpush1.bf16.msra.mxu0 %v691
      %809 = vmatprep.subr.bf16.mxu0 0
      %810 = vmatpush1.bf16.msra.mxu0 %v692
      %811 = vmatprep.subr.bf16.mxu0 0
      %812 = vmatpush1.bf16.msra.mxu0 %v693
      %813 = vmatprep.subr.bf16.mxu0 0
      %814 = vmatpush1.bf16.msra.mxu0 %v694
      %815 = vmatprep.mubr.bf16.mxu0 %v421
      %816 = vmatmul.mubr.bf16.gmra.mrb[0].mxu0 %v420
      %v817 = vpop.f32.mrb[0].mxu0
      %v818 = vadd.f32 %v778, %v817
      %v819 = vpop.f32.mrb[0].mxu0
      %v820 = vpop.f32.mrb[0].mxu0
      %v821 = vpop.f32.mrb[0].mxu0
      %822 = vdwg.mxu0
      %823 = vmatprep.subr.bf16.mxu0 0
      %824 = vmatpush1.bf16.msra.mxu0 %v695
      %825 = vmatprep.subr.bf16.mxu0 0
      %826 = vmatpush1.bf16.msra.mxu0 %v696
      %827 = vmatprep.subr.bf16.mxu0 0
      %828 = vmatpush1.bf16.msra.mxu0 %v697
      %829 = vmatprep.subr.bf16.mxu0 0
      %830 = vmatpush1.bf16.msra.mxu0 %v698
      %831 = vmatprep.subr.bf16.mxu0 0
      %832 = vmatpush1.bf16.msra.mxu0 %v699
      %833 = vmatprep.subr.bf16.mxu0 0
      %834 = vmatpush1.bf16.msra.mxu0 %v700
      %835 = vmatprep.subr.bf16.mxu0 0
      %836 = vmatpush1.bf16.msra.mxu0 %v701
      %837 = vmatprep.subr.bf16.mxu0 0
      %838 = vmatpush1.bf16.msra.mxu0 %v702
      %839 = vmatprep.subr.bf16.mxu0 0
      %840 = vmatpush1.bf16.msra.mxu0 0
      %841 = vmatprep.subr.bf16.mxu0 0
      %842 = vmatpush1.bf16.msra.mxu0 0
      %843 = vmatprep.subr.bf16.mxu0 0
      %844 = vmatpush1.bf16.msra.mxu0 0
      %845 = vmatprep.subr.bf16.mxu0 0
      %846 = vmatpush1.bf16.msra.mxu0 0
      %847 = vmatprep.subr.bf16.mxu0 0
      %848 = vmatpush1.bf16.msra.mxu0 0
      %849 = vmatprep.subr.bf16.mxu0 0
      %850 = vmatpush1.bf16.msra.mxu0 0
      %851 = vmatprep.subr.bf16.mxu0 0
      %852 = vmatpush1.bf16.msra.mxu0 0
      %853 = vmatprep.subr.bf16.mxu0 0
      %854 = vmatpush1.bf16.msra.mxu0 0
      %855 = vmatprep.mubr.bf16.mxu0 0
      %856 = vmatmul.mubr.bf16.gmra.mrb[0].mxu0 %v422
      %v857 = vpop.f32.mrb[0].mxu0
      %v858 = vadd.f32 %v818, %v857
      %v859 = vpop.f32.mrb[0].mxu0
      %v860 = vpop.f32.mrb[0].mxu0
      %v861 = vpop.f32.mrb[0].mxu0
      %862 = vdwg.mxu0
      %vm863 = vcmask 31744
      %864 = vst.msk [vmem:[%s192] sm:$0xff] %vm863, %v858
      %p865 = scmp.lt.s32.totalorder %s15, 1
      %s866 = scalar_select %p865, %s15, 1
      %s867 = smul.addr %s866, 8
      %s868 = scalar_lea.vmem %s4, %s867
      // Predicated region
      $region37: #{tpu_custom_call.1} parent=35 // pred_check
        %p869 = pneg %p122
      $region38: #{tpu_custom_call.1} parent=35 // pred_check_branch
        %871 = sbr.rel (%p869) target = $region40
      $region39: #{tpu_custom_call.1} parent=35 // pred_region
        _
      $region40: #{tpu_custom_call.1} parent=35 // pred_fallthru
        _
    $region36: #{tpu_custom_call.1} parent=5 // pred_fallthru
      _
    %p872 = scmp.le.s32.totalorder 2, %s10
    // Predicated region
    $region41: #{tpu_custom_call.1} parent=5 // pred_check
      %p873 = pneg %p872
    $region42: #{tpu_custom_call.1} parent=5 // pred_check_branch
      %875 = sbr.rel (%p873) target = $region44
    $region43: #{tpu_custom_call.1} parent=5 // pred_region
      %s876 = ssub.s32 %s10, 2
      // Predicated region
      $region45: #{tpu_custom_call.1} parent=43 // pred_check
        %p877 = pneg %p128
      $region46: #{tpu_custom_call.1} parent=43 // pred_check_branch
        %879 = sbr.rel (%p877) target = $region48
      $region47: #{tpu_custom_call.1} parent=43 // pred_region
        %p880 = scmp.lt.s32.totalorder %s16, 1
        %s881 = scalar_select %p880, %s16, 1
        %s882 = smul.addr %s881, 8
        %s883 = scalar_lea.vmem %s4, %s882
      $region48: #{tpu_custom_call.1} parent=43 // pred_fallthru
        _
    $region44: #{tpu_custom_call.1} parent=5 // pred_fallthru
      _
  $region6: #{tpu_custom_call.1} parent=0 // loop_footer
    %s14 = sadd.s32 1, %s10
  $region7: #{tpu_custom_call.1} parent=0 // loop_footer_branch
    %9 = sbr.rel target = $region3
  $region8: #{tpu_custom_call.1} parent=0 // loop_exit
    _

</llo_original>
